<compile_context>
chip_gen: v6e
topology: v6e:2x2x1
jax: 0.10.0
libtpu: 0.0.40
codegen_flags: <defaults>
</compile_context>

<pallas_src>
import functools

import jax
import jax.numpy as jnp
from jax.experimental import pallas as pl
from jax.experimental.pallas import tpu as pltpu


# ----------------------------------------------------------------------------
# Fused StateUpdate kernel
# ----------------------------------------------------------------------------

def _state_update_kernel(num_graphs,
                         sites_ref, bonds_ref, states_ref, g2s_ref, g2b_ref,
                         w1b_ref, w1s_ref, w1st_ref, b1_ref,
                         w2_ref, b2_ref, w3_ref, b3_ref,
                         out_ref):
    f32 = jnp.float32
    sites = sites_ref[...]        # (N, Fs)
    bonds = bonds_ref[...]        # (E, Fb)
    states = states_ref[...]      # (B, Fst)

    def segment_mean(values, seg_ids_row):
        # Membership mask built in-register; segment-sum as an MXU matmul.
        rows = values.shape[0]
        gid = jax.lax.broadcasted_iota(jnp.int32, (num_graphs, rows), 0)
        mask = (gid == seg_ids_row).astype(f32)                       # (B, rows)
        counts = jnp.maximum(jnp.sum(mask, axis=1, keepdims=True), 1.0)
        total = jnp.dot(mask, values, preferred_element_type=f32)     # (B, F)
        return total / counts

    bonds_pool = segment_mean(bonds, g2b_ref[...])                    # (B, Fb)
    sites_pool = segment_mean(sites, g2s_ref[...])                    # (B, Fs)

    # fc1 over the virtual concat [bonds_pool | sites_pool | states]
    # (weight row-split eliminates the concat; three matmuls accumulate in f32).
    h = (jnp.dot(bonds_pool, w1b_ref[...], preferred_element_type=f32)
         + jnp.dot(sites_pool, w1s_ref[...], preferred_element_type=f32)
         + jnp.dot(states, w1st_ref[...], preferred_element_type=f32)
         + b1_ref[...])
    h = jnp.maximum(h, 0.0)
    h = jnp.maximum(
        jnp.dot(h, w2_ref[...], preferred_element_type=f32) + b2_ref[...], 0.0)
    y = jnp.maximum(
        jnp.dot(h, w3_ref[...], preferred_element_type=f32) + b3_ref[...], 0.0)
    out_ref[...] = y.astype(out_ref.dtype)


def state_update(sites, bonds, states, graph_to_sites, graph_to_bonds, params):
    """Full StateUpdate forward (scatter_mean x2 + concat + 3-layer ReLU MLP)
    in a single pallas_call with whole-array VMEM blocks."""
    num_graphs, state_len = states.shape
    g2s = graph_to_sites.astype(jnp.int32).reshape(1, sites.shape[0])
    g2b = graph_to_bonds.astype(jnp.int32).reshape(1, bonds.shape[0])

    vmem = pl.BlockSpec(memory_space=pltpu.MemorySpace.VMEM)
    return pl.pallas_call(
        functools.partial(_state_update_kernel, num_graphs),
        out_shape=jax.ShapeDtypeStruct((num_graphs, state_len), jnp.float32),
        in_specs=[vmem] * 13,
        out_specs=vmem,
    )(sites, bonds, states, g2s, g2b,
      params["w1_bonds"], params["w1_sites"], params["w1_states"], params["b1"],
      params["w2"], params["b2"], params["w3"], params["b3"])


# ----------------------------------------------------------------------------
# Pure-JAX reference (for correctness check only)
# ----------------------------------------------------------------------------

def state_update_reference(sites, bonds, states, g2s, g2b, params):
    num_graphs = states.shape[0]

    def seg_mean(values, idx):
        s = jax.ops.segment_sum(values, idx, num_segments=num_graphs)
        c = jax.ops.segment_sum(jnp.ones((values.shape[0],), jnp.float32),
                                idx, num_segments=num_graphs)
        return s / jnp.maximum(c, 1.0)[:, None]

    bp = seg_mean(bonds, g2b)
    sp = seg_mean(sites, g2s)
    v = jnp.concatenate([bp, sp, states], axis=1)
    w1 = jnp.concatenate(
        [params["w1_bonds"], params["w1_sites"], params["w1_states"]], axis=0)
    h = jax.nn.relu(v @ w1 + params["b1"])
    h = jax.nn.relu(h @ params["w2"] + params["b2"])
    return jax.nn.relu(h @ params["w3"] + params["b3"])


# ----------------------------------------------------------------------------
# Parameters (PyTorch nn.Linear-style uniform init; fc1 stored row-split)
# ----------------------------------------------------------------------------

def make_params(key, site_len, bond_len, state_len, h1, h2):
    keys = jax.random.split(key, 8)
    in1 = site_len + bond_len + state_len
    b1nd = 1.0 / float(in1) ** 0.5
    b2nd = 1.0 / float(h1) ** 0.5
    b3nd = 1.0 / float(h2) ** 0.5
    u = jax.random.uniform
    return {
        # fc1 weight split along its input rows: [bonds | sites | states]
        "w1_bonds": u(keys[0], (bond_len, h1), jnp.float32, -b1nd, b1nd),
        "w1_sites": u(keys[1], (site_len, h1), jnp.float32, -b1nd, b1nd),
        "w1_states": u(keys[2], (state_len, h1), jnp.float32, -b1nd, b1nd),
        "b1": u(keys[3], (1, h1), jnp.float32, -b1nd, b1nd),
        "w2": u(keys[4], (h1, h2), jnp.float32, -b2nd, b2nd),
        "b2": u(keys[5], (1, h2), jnp.float32, -b2nd, b2nd),
        "w3": u(keys[6], (h2, state_len), jnp.float32, -b3nd, b3nd),
        "b3": u(keys[7], (1, state_len), jnp.float32, -b3nd, b3nd),
    }


# ----------------------------------------------------------------------------
# Main
# ----------------------------------------------------------------------------

if __name__ == "__main__":
    SITE_LEN, BOND_LEN, STATE_LEN = 16, 16, 8
    H1, H2 = 32, 16
    B, N, E = 2, 8, 16               # graphs, sites, bonds

    key = jax.random.PRNGKey(0)
    kp, kd = jax.random.split(key)
    params = make_params(kp, SITE_LEN, BOND_LEN, STATE_LEN, H1, H2)

    k1, k2, k3, k4 = jax.random.split(kd, 4)
    sites = jax.random.normal(k1, (N, SITE_LEN), jnp.float32)
    bonds = jax.random.normal(k2, (E, BOND_LEN), jnp.float32)
    states = jax.random.normal(k3, (B, STATE_LEN), jnp.float32)
    graph_to_sites = jnp.concatenate(
        [jnp.zeros((N // 2,), jnp.int32), jnp.ones((N - N // 2,), jnp.int32)])
    graph_to_bonds = jax.random.randint(k4, (E,), 0, B, jnp.int32)

    fwd = jax.jit(functools.partial(state_update, params=params))
    out = jax.block_until_ready(
        fwd(sites, bonds, states, graph_to_sites, graph_to_bonds))

    assert out.shape == (B, STATE_LEN) and out.dtype == jnp.float32
    ref = state_update_reference(sites, bonds, states,
                                 graph_to_sites, graph_to_bonds, params)
    assert bool(jnp.all(jnp.isfinite(out)))
    assert bool(jnp.allclose(out, ref, atol=1e-2, rtol=1e-2)), (out, ref)
    print("KERNEL_OK")
</pallas_src>

<mosaic_0001>
module attributes {stable_mosaic.version = 11 : i64} {
  func.func @_state_update_kernel(%arg0: memref<8x16xf32, #tpu.memory_space<vmem>>, %arg1: memref<16x16xf32, #tpu.memory_space<vmem>>, %arg2: memref<2x8xf32, #tpu.memory_space<vmem>>, %arg3: memref<1x8xi32, #tpu.memory_space<vmem>>, %arg4: memref<1x16xi32, #tpu.memory_space<vmem>>, %arg5: memref<16x32xf32, #tpu.memory_space<vmem>>, %arg6: memref<16x32xf32, #tpu.memory_space<vmem>>, %arg7: memref<8x32xf32, #tpu.memory_space<vmem>>, %arg8: memref<1x32xf32, #tpu.memory_space<vmem>>, %arg9: memref<32x16xf32, #tpu.memory_space<vmem>>, %arg10: memref<1x16xf32, #tpu.memory_space<vmem>>, %arg11: memref<16x8xf32, #tpu.memory_space<vmem>>, %arg12: memref<1x8xf32, #tpu.memory_space<vmem>>, %arg13: memref<2x8xf32, #tpu.memory_space<vmem>>) attributes {dimension_semantics = [], scalar_prefetch = 0 : i64, scratch_operands = 0 : i64, tpu.core_type = #tpu.core_type<tc>} {
    %c0 = arith.constant 0 : index
    %c0_0 = arith.constant 0 : index
    %0 = vector.load %arg0[%c0, %c0_0] : memref<8x16xf32, #tpu.memory_space<vmem>>, vector<8x16xf32>
    %c0_1 = arith.constant 0 : index
    %c0_2 = arith.constant 0 : index
    %1 = vector.load %arg1[%c0_1, %c0_2] : memref<16x16xf32, #tpu.memory_space<vmem>>, vector<16x16xf32>
    %c0_3 = arith.constant 0 : index
    %c0_4 = arith.constant 0 : index
    %2 = vector.load %arg2[%c0_3, %c0_4] : memref<2x8xf32, #tpu.memory_space<vmem>>, vector<2x8xf32>
    %c0_5 = arith.constant 0 : index
    %c0_6 = arith.constant 0 : index
    %3 = vector.load %arg4[%c0_5, %c0_6] : memref<1x16xi32, #tpu.memory_space<vmem>>, vector<1x16xi32>
    %4 = tpu.iota {dimensions = array<i32: 0>} : vector<2x16xi32>
    %5 = vector.broadcast %3 : vector<1x16xi32> to vector<2x16xi32>
    %6 = arith.cmpi eq, %4, %5 : vector<2x16xi32>
    %7 = arith.extui %6 : vector<2x16xi1> to vector<2x16xi32>
    %8 = arith.sitofp %7 : vector<2x16xi32> to vector<2x16xf32>
    %cst = arith.constant dense<0.000000e+00> : vector<2xf32>
    %9 = vector.multi_reduction <add>, %8, %cst [1] : vector<2x16xf32> to vector<2xf32>
    %10 = vector.shape_cast %9 : vector<2xf32> to vector<2x1xf32>
    %cst_7 = arith.constant 1.000000e+00 : f32
    %11 = vector.broadcast %cst_7 : f32 to vector<2x1xf32>
    %12 = arith.maximumf %10, %11 : vector<2x1xf32>
    %cst_8 = arith.constant dense<0.000000e+00> : vector<2x16xf32>
    %13 = tpu.matmul %8, %1, %cst_8 {dimension_numbers = #tpu.dot_dimension_numbers<[1], [0], [0], [1], [0, 0, 1, 1], [], []>} : vector<2x16xf32>, vector<16x16xf32>, vector<2x16xf32> -> vector<2x16xf32>
    %14 = vector.broadcast %12 : vector<2x1xf32> to vector<2x16xf32>
    %15 = arith.divf %13, %14 : vector<2x16xf32>
    %c0_9 = arith.constant 0 : index
    %c0_10 = arith.constant 0 : index
    %16 = vector.load %arg3[%c0_9, %c0_10] : memref<1x8xi32, #tpu.memory_space<vmem>>, vector<1x8xi32>
    %17 = tpu.iota {dimensions = array<i32: 0>} : vector<2x8xi32>
    %18 = vector.broadcast %16 : vector<1x8xi32> to vector<2x8xi32>
    %19 = arith.cmpi eq, %17, %18 : vector<2x8xi32>
    %20 = arith.extui %19 : vector<2x8xi1> to vector<2x8xi32>
    %21 = arith.sitofp %20 : vector<2x8xi32> to vector<2x8xf32>
    %cst_11 = arith.constant dense<0.000000e+00> : vector<2xf32>
    %22 = vector.multi_reduction <add>, %21, %cst_11 [1] : vector<2x8xf32> to vector<2xf32>
    %23 = vector.shape_cast %22 : vector<2xf32> to vector<2x1xf32>
    %cst_12 = arith.constant 1.000000e+00 : f32
    %24 = vector.broadcast %cst_12 : f32 to vector<2x1xf32>
    %25 = arith.maximumf %23, %24 : vector<2x1xf32>
    %cst_13 = arith.constant dense<0.000000e+00> : vector<2x16xf32>
    %26 = tpu.matmul %21, %0, %cst_13 {dimension_numbers = #tpu.dot_dimension_numbers<[1], [0], [0], [1], [0, 0, 1, 1], [], []>} : vector<2x8xf32>, vector<8x16xf32>, vector<2x16xf32> -> vector<2x16xf32>
    %27 = vector.broadcast %25 : vector<2x1xf32> to vector<2x16xf32>
    %28 = arith.divf %26, %27 : vector<2x16xf32>
    %c0_14 = arith.constant 0 : index
    %c0_15 = arith.constant 0 : index
    %29 = vector.load %arg5[%c0_14, %c0_15] : memref<16x32xf32, #tpu.memory_space<vmem>>, vector<16x32xf32>
    %cst_16 = arith.constant dense<0.000000e+00> : vector<2x32xf32>
    %30 = tpu.matmul %15, %29, %cst_16 {dimension_numbers = #tpu.dot_dimension_numbers<[1], [0], [0], [1], [0, 0, 1, 1], [], []>} : vector<2x16xf32>, vector<16x32xf32>, vector<2x32xf32> -> vector<2x32xf32>
    %c0_17 = arith.constant 0 : index
    %c0_18 = arith.constant 0 : index
    %31 = vector.load %arg6[%c0_17, %c0_18] : memref<16x32xf32, #tpu.memory_space<vmem>>, vector<16x32xf32>
    %cst_19 = arith.constant dense<0.000000e+00> : vector<2x32xf32>
    %32 = tpu.matmul %28, %31, %cst_19 {dimension_numbers = #tpu.dot_dimension_numbers<[1], [0], [0], [1], [0, 0, 1, 1], [], []>} : vector<2x16xf32>, vector<16x32xf32>, vector<2x32xf32> -> vector<2x32xf32>
    %33 = arith.addf %30, %32 : vector<2x32xf32>
    %c0_20 = arith.constant 0 : index
    %c0_21 = arith.constant 0 : index
    %34 = vector.load %arg7[%c0_20, %c0_21] : memref<8x32xf32, #tpu.memory_space<vmem>>, vector<8x32xf32>
    %cst_22 = arith.constant dense<0.000000e+00> : vector<2x32xf32>
    %35 = tpu.matmul %2, %34, %cst_22 {dimension_numbers = #tpu.dot_dimension_numbers<[1], [0], [0], [1], [0, 0, 1, 1], [], []>} : vector<2x8xf32>, vector<8x32xf32>, vector<2x32xf32> -> vector<2x32xf32>
    %36 = arith.addf %33, %35 : vector<2x32xf32>
    %c0_23 = arith.constant 0 : index
    %c0_24 = arith.constant 0 : index
    %37 = vector.load %arg8[%c0_23, %c0_24] : memref<1x32xf32, #tpu.memory_space<vmem>>, vector<1x32xf32>
    %38 = vector.broadcast %37 : vector<1x32xf32> to vector<2x32xf32>
    %39 = arith.addf %36, %38 : vector<2x32xf32>
    %cst_25 = arith.constant 0.000000e+00 : f32
    %40 = vector.broadcast %cst_25 : f32 to vector<2x32xf32>
    %41 = arith.maximumf %39, %40 : vector<2x32xf32>
    %c0_26 = arith.constant 0 : index
    %c0_27 = arith.constant 0 : index
    %42 = vector.load %arg9[%c0_26, %c0_27] : memref<32x16xf32, #tpu.memory_space<vmem>>, vector<32x16xf32>
    %cst_28 = arith.constant dense<0.000000e+00> : vector<2x16xf32>
    %43 = tpu.matmul %41, %42, %cst_28 {dimension_numbers = #tpu.dot_dimension_numbers<[1], [0], [0], [1], [0, 0, 1, 1], [], []>} : vector<2x32xf32>, vector<32x16xf32>, vector<2x16xf32> -> vector<2x16xf32>
    %c0_29 = arith.constant 0 : index
    %c0_30 = arith.constant 0 : index
    %44 = vector.load %arg10[%c0_29, %c0_30] : memref<1x16xf32, #tpu.memory_space<vmem>>, vector<1x16xf32>
    %45 = vector.broadcast %44 : vector<1x16xf32> to vector<2x16xf32>
    %46 = arith.addf %43, %45 : vector<2x16xf32>
    %cst_31 = arith.constant 0.000000e+00 : f32
    %47 = vector.broadcast %cst_31 : f32 to vector<2x16xf32>
    %48 = arith.maximumf %46, %47 : vector<2x16xf32>
    %c0_32 = arith.constant 0 : index
    %c0_33 = arith.constant 0 : index
    %49 = vector.load %arg11[%c0_32, %c0_33] : memref<16x8xf32, #tpu.memory_space<vmem>>, vector<16x8xf32>
    %cst_34 = arith.constant dense<0.000000e+00> : vector<2x8xf32>
    %50 = tpu.matmul %48, %49, %cst_34 {dimension_numbers = #tpu.dot_dimension_numbers<[1], [0], [0], [1], [0, 0, 1, 1], [], []>} : vector<2x16xf32>, vector<16x8xf32>, vector<2x8xf32> -> vector<2x8xf32>
    %c0_35 = arith.constant 0 : index
    %c0_36 = arith.constant 0 : index
    %51 = vector.load %arg12[%c0_35, %c0_36] : memref<1x8xf32, #tpu.memory_space<vmem>>, vector<1x8xf32>
    %52 = vector.broadcast %51 : vector<1x8xf32> to vector<2x8xf32>
    %53 = arith.addf %50, %52 : vector<2x8xf32>
    %cst_37 = arith.constant 0.000000e+00 : f32
    %54 = vector.broadcast %cst_37 : f32 to vector<2x8xf32>
    %55 = arith.maximumf %53, %54 : vector<2x8xf32>
    %c0_38 = arith.constant 0 : index
    %c0_39 = arith.constant 0 : index
    %56 = vector.load %arg13[%c0_38, %c0_39] : memref<2x8xf32, #tpu.memory_space<vmem>>, vector<2x8xf32>
    tpu.vector_store %arg13[%c0_38, %c0_39], %55 {strides = array<i32>} : memref<2x8xf32, #tpu.memory_space<vmem>>, vector<2x8xf32>,
    return
  }
}

</mosaic_0001>

<llo_original>
// kernel: state_update.1
$region0: #{state_update.1}
  #allocation0 [shape = 'u32[]', space=smem, size = 0x4, offset = 0x4, fixed_abs, tag = 'smem constant byte address 0x4 - core index']
  #allocation1 [shape = 'u32[144,128]{1,0:T(1,128)}', space=vmem, size = 0x12000, scoped, tag = 'internal scratch']
  %s0 = inlined_call_operand.hbm [shape: f32[8,16], index: 0, kind: input, shape index: {}]
  %s1 = inlined_call_operand.hbm [shape: f32[16,16], index: 1, kind: input, shape index: {}]
  %s2 = inlined_call_operand.vmem [shape: f32[2,8], index: 2, kind: input, shape index: {}]
  %s3 = inlined_call_operand.vmem [shape: s32[1,8], index: 3, kind: input, shape index: {}]
  %s4 = inlined_call_operand.vmem [shape: s32[1,16], index: 4, kind: input, shape index: {}]
  %s5 = inlined_call_operand.hbm [shape: f32[16,32], index: 5, kind: input, shape index: {}]
  %s6 = inlined_call_operand.hbm [shape: f32[16,32], index: 6, kind: input, shape index: {}]
  %s7 = inlined_call_operand.hbm [shape: f32[8,32], index: 7, kind: input, shape index: {}]
  %s8 = inlined_call_operand.vmem [shape: f32[1,32], index: 8, kind: input, shape index: {}]
  %s9 = inlined_call_operand.hbm [shape: f32[32,16], index: 9, kind: input, shape index: {}]
  %s10 = inlined_call_operand.vmem [shape: f32[1,16], index: 10, kind: input, shape index: {}]
  %s11 = inlined_call_operand.vmem [shape: f32[16,8], index: 11, kind: input, shape index: {}]
  %s12 = inlined_call_operand.vmem [shape: f32[1,8], index: 12, kind: input, shape index: {}]
  %s13 = inlined_call_operand.hbm [shape: f32[2,8], index: 13, kind: output, shape index: {}]
  %s14 = sld [smem:[#allocation0]]
  $region86: #{state_update.1} parent=0
    _
  %s16 = ssub.s32 1, %s14
  %s17 = scalar_select 0, %s16, %s14
  $region1: #{state_update.1} parent=0
    #allocation2 [shape = 'u8[4096]{0}', space=vmem, size = 0x1000, scoped, tag = 'input window, operand 0, single buffered']
    #allocation3 [shape = 's32[1]{0}', space=sflag, size = 0x4, scoped, tag = 'scoped memory for state_update.1']
    #allocation4 [shape = 's32[1]{0}', space=sflag, size = 0x4, scoped, tag = 'scoped memory for state_update.1']
    #allocation5 [shape = 'u8[8192]{0}', space=vmem, size = 0x2000, scoped, tag = 'input window, operand 1, single buffered']
    #allocation6 [shape = 's32[1]{0}', space=sflag, size = 0x4, scoped, tag = 'scoped memory for state_update.1']
    #allocation7 [shape = 'u8[8192]{0}', space=vmem, size = 0x2000, scoped, tag = 'input window, operand 5, single buffered']
    #allocation8 [shape = 'u8[8192]{0}', space=vmem, size = 0x2000, scoped, tag = 'input window, operand 6, single buffered']
    #allocation9 [shape = 's32[1]{0}', space=sflag, size = 0x4, scoped, tag = 'scoped memory for state_update.1']
    #allocation10 [shape = 'u8[4096]{0}', space=vmem, size = 0x1000, scoped, tag = 'input window, operand 7, single buffered']
    #allocation11 [shape = 'u8[16384]{0}', space=vmem, size = 0x4000, scoped, tag = 'input window, operand 9, single buffered']
    #allocation12 [shape = 's32[1]{0}', space=sflag, size = 0x4, scoped, tag = 'scoped memory for state_update.1']
    #allocation13 [shape = 'u8[1024]{0}', space=vmem, size = 0x400, scoped, tag = 'output window, operand 0, single buffered']
    %18 = vsyncpa [#allocation3], 0
    %19 = vsyncpa [#allocation6], 0
    %20 = vsyncpa [#allocation9], 0
    %21 = vsyncpa [#allocation12], 0
    %22 = vsyncpa [#allocation4], 0
    // Predicated region
    $region2: #{state_update.1} parent=1 // pred_check
      _
    $region3: #{state_update.1} parent=1 // pred_check_branch
      %24 = sbr.rel (0) target = $region5
    $region4: #{state_update.1} parent=1 // pred_region
      %s26 = ssub.s32 128, 128
      %27 = vsyncadd [#allocation3], %s26
      %s29 = sshll.u32 [#allocation2], 4
      %s30 = int_to_ptr.vmem [resolvable:$true] %s29
      %32 = dma.hbm_to_vmem [thread:$0]  %s0, 128, %s30, [#allocation3]
    $region5: #{state_update.1} parent=1 // pred_fallthru
      _
    // Predicated region
    $region6: #{state_update.1} parent=1 // pred_check
      _
    $region7: #{state_update.1} parent=1 // pred_check_branch
      %34 = sbr.rel (0) target = $region9
    $region8: #{state_update.1} parent=1 // pred_region
      %s36 = ssub.s32 256, 256
      %37 = vsyncadd [#allocation6], %s36
      %s38 = sshll.u32 [#allocation5], 4
      %s39 = int_to_ptr.vmem [resolvable:$true] %s38
      %44 = dma.hbm_to_vmem [thread:$0]  %s1, 256, %s39, [#allocation6], 128, 128, 8
    $region9: #{state_update.1} parent=1 // pred_fallthru
      _
    // Predicated region
    $region10: #{state_update.1} parent=1 // pred_check
      _
    $region11: #{state_update.1} parent=1 // pred_check_branch
      %46 = sbr.rel (0) target = $region13
    $region12: #{state_update.1} parent=1 // pred_region
      _
    $region13: #{state_update.1} parent=1 // pred_fallthru
      _
    // Predicated region
    $region14: #{state_update.1} parent=1 // pred_check
      _
    $region15: #{state_update.1} parent=1 // pred_check_branch
      %48 = sbr.rel (0) target = $region17
    $region16: #{state_update.1} parent=1 // pred_region
      _
    $region17: #{state_update.1} parent=1 // pred_fallthru
      _
    // Predicated region
    $region18: #{state_update.1} parent=1 // pred_check
      _
    $region19: #{state_update.1} parent=1 // pred_check_branch
      %50 = sbr.rel (0) target = $region21
    $region20: #{state_update.1} parent=1 // pred_region
      _
    $region21: #{state_update.1} parent=1 // pred_fallthru
      _
    // Predicated region
    $region22: #{state_update.1} parent=1 // pred_check
      _
    $region23: #{state_update.1} parent=1 // pred_check_branch
      %52 = sbr.rel (0) target = $region25
    $region24: #{state_update.1} parent=1 // pred_region
      %s54 = ssub.s32 256, 256
      %55 = vsyncadd [#allocation6], %s54
      %s56 = sshll.u32 [#allocation7], 4
      %s57 = int_to_ptr.vmem [resolvable:$true] %s56
      %62 = dma.hbm_to_vmem [thread:$0]  %s5, 256, %s57, [#allocation6], 128, 128, 8
    $region25: #{state_update.1} parent=1 // pred_fallthru
      _
    // Predicated region
    $region26: #{state_update.1} parent=1 // pred_check
      _
    $region27: #{state_update.1} parent=1 // pred_check_branch
      %64 = sbr.rel (0) target = $region29
    $region28: #{state_update.1} parent=1 // pred_region
      %s66 = ssub.s32 256, 256
      %67 = vsyncadd [#allocation9], %s66
      %s68 = sshll.u32 [#allocation8], 4
      %s69 = int_to_ptr.vmem [resolvable:$true] %s68
      %74 = dma.hbm_to_vmem [thread:$0]  %s6, 256, %s69, [#allocation9], 128, 128, 8
    $region29: #{state_update.1} parent=1 // pred_fallthru
      _
    // Predicated region
    $region30: #{state_update.1} parent=1 // pred_check
      _
    $region31: #{state_update.1} parent=1 // pred_check_branch
      %76 = sbr.rel (0) target = $region33
    $region32: #{state_update.1} parent=1 // pred_region
      %s78 = ssub.s32 128, 128
      %79 = vsyncadd [#allocation9], %s78
      %s81 = sshll.u32 [#allocation10], 4
      %s82 = int_to_ptr.vmem [resolvable:$true] %s81
      %84 = dma.hbm_to_vmem [thread:$0]  %s7, 128, %s82, [#allocation9]
    $region33: #{state_update.1} parent=1 // pred_fallthru
      _
    // Predicated region
    $region34: #{state_update.1} parent=1 // pred_check
      _
    $region35: #{state_update.1} parent=1 // pred_check_branch
      %86 = sbr.rel (0) target = $region37
    $region36: #{state_update.1} parent=1 // pred_region
      _
    $region37: #{state_update.1} parent=1 // pred_fallthru
      _
    // Predicated region
    $region38: #{state_update.1} parent=1 // pred_check
      _
    $region39: #{state_update.1} parent=1 // pred_check_branch
      %88 = sbr.rel (0) target = $region41
    $region40: #{state_update.1} parent=1 // pred_region
      %s90 = ssub.s32 512, 512
      %91 = vsyncadd [#allocation12], %s90
      %s92 = sshll.u32 [#allocation11], 4
      %s93 = int_to_ptr.vmem [resolvable:$true] %s92
      %98 = dma.hbm_to_vmem [thread:$0]  %s9, 512, %s93, [#allocation12], 128, 128, 8
    $region41: #{state_update.1} parent=1 // pred_fallthru
      _
    // Predicated region
    $region42: #{state_update.1} parent=1 // pred_check
      _
    $region43: #{state_update.1} parent=1 // pred_check_branch
      %100 = sbr.rel (0) target = $region45
    $region44: #{state_update.1} parent=1 // pred_region
      _
    $region45: #{state_update.1} parent=1 // pred_fallthru
      _
    // Predicated region
    $region46: #{state_update.1} parent=1 // pred_check
      _
    $region47: #{state_update.1} parent=1 // pred_check_branch
      %102 = sbr.rel (0) target = $region49
    $region48: #{state_update.1} parent=1 // pred_region
      _
    $region49: #{state_update.1} parent=1 // pred_fallthru
      _
    // Predicated region
    $region50: #{state_update.1} parent=1 // pred_check
      _
    $region51: #{state_update.1} parent=1 // pred_check_branch
      %104 = sbr.rel (0) target = $region53
    $region52: #{state_update.1} parent=1 // pred_region
      _
    $region53: #{state_update.1} parent=1 // pred_fallthru
      _
    // Predicated region
    $region54: #{state_update.1} parent=1 // pred_check
      _
    $region55: #{state_update.1} parent=1 // pred_check_branch
      %106 = sbr.rel (0) target = $region57
    $region56: #{state_update.1} parent=1 // pred_region
      %107 = dma.done [#allocation3], 128
    $region57: #{state_update.1} parent=1 // pred_fallthru
      _
    // Predicated region
    $region58: #{state_update.1} parent=1 // pred_check
      _
    $region59: #{state_update.1} parent=1 // pred_check_branch
      %109 = sbr.rel (0) target = $region61
    $region60: #{state_update.1} parent=1 // pred_region
      %110 = dma.done [#allocation6], 256
    $region61: #{state_update.1} parent=1 // pred_fallthru
      _
    // Predicated region
    $region62: #{state_update.1} parent=1 // pred_check
      _
    $region63: #{state_update.1} parent=1 // pred_check_branch
      %112 = sbr.rel (0) target = $region65
    $region64: #{state_update.1} parent=1 // pred_region
      %113 = dma.done [#allocation6], 256
    $region65: #{state_update.1} parent=1 // pred_fallthru
      _
    // Predicated region
    $region66: #{state_update.1} parent=1 // pred_check
      _
    $region67: #{state_update.1} parent=1 // pred_check_branch
      %115 = sbr.rel (0) target = $region69
    $region68: #{state_update.1} parent=1 // pred_region
      %116 = dma.done [#allocation9], 256
    $region69: #{state_update.1} parent=1 // pred_fallthru
      _
    // Predicated region
    $region70: #{state_update.1} parent=1 // pred_check
      _
    $region71: #{state_update.1} parent=1 // pred_check_branch
      %118 = sbr.rel (0) target = $region73
    $region72: #{state_update.1} parent=1 // pred_region
      %119 = dma.done [#allocation9], 128
    $region73: #{state_update.1} parent=1 // pred_fallthru
      _
    // Predicated region
    $region74: #{state_update.1} parent=1 // pred_check
      _
    $region75: #{state_update.1} parent=1 // pred_check_branch
      %121 = sbr.rel (0) target = $region77
    $region76: #{state_update.1} parent=1 // pred_region
      %122 = dma.done [#allocation12], 512
    $region77: #{state_update.1} parent=1 // pred_fallthru
      _
    %v123 = vld [vmem:[#allocation2] sm:$0xff]
    %v124 = vld [vmem:[#allocation5] sm:$0xff]
    %v125 = vld [vmem:[#allocation5 + $0x8] sm:$0xff]
    %v126 = vld [vmem:[%s2] sm:$0x3]
    %v127 = vld [vmem:[%s4] sm:$0x1]
    %v128 = vlaneseq
    %v129 = vshrl.u32 %v128, 7
    %v130 = vlaneseq
    %v131 = vshrl.u32 %v130, 7
    %v132 = vsub.s32 0, %v131
    %v133 = vrot.slane %v127, %v132
    %vm134 = vcmp.eq.s32.totalorder %v129, %v133
    %v135 = vsel %vm134, 1, 0
    %v136 = vcvt.s32.f32 %v135
    %vm137 = vcmask 123904
    %v138 = vsel %vm137, %v136, 0.0
    %139 = vadd.xlane.f32.xlu0 %v138
    %v140 = vpop.xlane.xlu0 %139
    %v141 = vmax.f32 %v140, 1.0
    %vm142 = vcmask 130048
    %v144 = vsel %vm142, %v136, 0
    %146 = vmatprep.subr.mxu0 0.0
    %147 = vmatpush1.msra.mxu0 0.0
    %148 = vmatprep.subr.mxu0 0.0
    %149 = vmatpush1.msra.mxu0 0.0
    %150 = vmatprep.subr.mxu0 0.0
    %151 = vmatpush1.msra.mxu0 0.0
    %152 = vmatprep.subr.mxu0 0.0
    %153 = vmatpush1.msra.mxu0 0.0
    %154 = vmatprep.subr.mxu0 0.0
    %155 = vmatpush1.msra.mxu0 0.0
    %156 = vmatprep.subr.mxu0 0.0
    %157 = vmatpush1.msra.mxu0 0.0
    %158 = vmatprep.subr.mxu0 0.0
    %159 = vmatpush1.msra.mxu0 0.0
    %160 = vmatprep.subr.mxu0 0.0
    %161 = vmatpush1.msra.mxu0 0.0
    %162 = vmatprep.subr.mxu0 0.0
    %163 = vmatpush1.msra.mxu0 0.0
    %164 = vmatprep.subr.mxu0 0.0
    %165 = vmatpush1.msra.mxu0 0.0
    %166 = vmatprep.subr.mxu0 0.0
    %167 = vmatpush1.msra.mxu0 0.0
    %168 = vmatprep.subr.mxu0 0.0
    %169 = vmatpush1.msra.mxu0 0.0
    %170 = vmatprep.subr.mxu0 0.0
    %171 = vmatpush1.msra.mxu0 0.0
    %172 = vmatprep.subr.mxu0 0.0
    %173 = vmatpush1.msra.mxu0 0.0
    %174 = vmatprep.subr.mxu0 0.0
    %175 = vmatpush1.msra.mxu0 %v125
    %176 = vmatprep.subr.mxu0 0.0
    %177 = vmatpush1.msra.mxu0 %v124
    %178 = vmatprep.subr.mxu0 0.0
    %179 = vmatpush2.msra.mxu0 0.0
    %180 = vmatprep.subr.mxu0 0.0
    %181 = vmatpush2.msra.mxu0 0.0
    %182 = vmatprep.subr.mxu0 0.0
    %183 = vmatpush2.msra.mxu0 0.0
    %184 = vmatprep.subr.mxu0 0.0
    %185 = vmatpush2.msra.mxu0 0.0
    %186 = vmatprep.subr.mxu0 0.0
    %187 = vmatpush2.msra.mxu0 0.0
    %188 = vmatprep.subr.mxu0 0.0
    %189 = vmatpush2.msra.mxu0 0.0
    %190 = vmatprep.subr.mxu0 0.0
    %191 = vmatpush2.msra.mxu0 0.0
    %192 = vmatprep.subr.mxu0 0.0
    %193 = vmatpush2.msra.mxu0 0.0
    %194 = vmatprep.subr.mxu0 0.0
    %195 = vmatpush2.msra.mxu0 0.0
    %196 = vmatprep.subr.mxu0 0.0
    %197 = vmatpush2.msra.mxu0 0.0
    %198 = vmatprep.subr.mxu0 0.0
    %199 = vmatpush2.msra.mxu0 0.0
    %200 = vmatprep.subr.mxu0 0.0
    %201 = vmatpush2.msra.mxu0 0.0
    %202 = vmatprep.subr.mxu0 0.0
    %203 = vmatpush2.msra.mxu0 0.0
    %204 = vmatprep.subr.mxu0 0.0
    %205 = vmatpush2.msra.mxu0 0.0
    %206 = vmatprep.subr.mxu0 0.0
    %207 = vmatpush2.msra.mxu0 0.0
    %208 = vmatprep.subr.mxu0 0.0
    %209 = vmatpush2.msra.mxu0 0.0
    %210 = vmatprep.mubr.f32.mxu0 0.0
    %211 = vmatmul.mubr.f32.gmra.mxu0 %v144
    %v212 = vpop.f32.mrf.mxu0
    %v213 = vadd.f32 0.0, %v212
    %v214 = vpop.f32.mrf.mxu0
    %215 = vdwg.mxu0
    %v216 = vrcp.pop %v141
    %v217 = vmul.f32 %v213, %v216
    %v218 = vld [vmem:[%s3] sm:$0x1]
    %v219 = vlaneseq
    %v220 = vshrl.u32 %v219, 7
    %v221 = vsub.s32 0, %v220
    %v222 = vrot.slane %v218, %v221
    %vm223 = vcmp.eq.s32.totalorder %v129, %v222
    %v224 = vsel %vm223, 1, 0
    %v225 = vcvt.s32.f32 %v224
    %vm226 = vcmask 58368
    %v227 = vsel %vm226, %v225, 0.0
    %228 = vadd.xlane.f32.xlu0 %v227
    %v229 = vpop.xlane.xlu0 %228
    %v230 = vmax.f32 %v229, 1.0
    %vm231 = vcmask 64512
    %v233 = vsel %vm231, %v225, 0
    %235 = vmatprep.subr.mxu0 0.0
    %236 = vmatpush1.msra.mxu0 0.0
    %237 = vmatprep.subr.mxu0 0.0
    %238 = vmatpush1.msra.mxu0 0.0
    %239 = vmatprep.subr.mxu0 0.0
    %240 = vmatpush1.msra.mxu0 0.0
    %241 = vmatprep.subr.mxu0 0.0
    %242 = vmatpush1.msra.mxu0 0.0
    %243 = vmatprep.subr.mxu0 0.0
    %244 = vmatpush1.msra.mxu0 0.0
    %245 = vmatprep.subr.mxu0 0.0
    %246 = vmatpush1.msra.mxu0 0.0
    %247 = vmatprep.subr.mxu0 0.0
    %248 = vmatpush1.msra.mxu0 0.0
    %249 = vmatprep.subr.mxu0 0.0
    %250 = vmatpush1.msra.mxu0 0.0
    %251 = vmatprep.subr.mxu0 0.0
    %252 = vmatpush1.msra.mxu0 0.0
    %253 = vmatprep.subr.mxu0 0.0
    %254 = vmatpush1.msra.mxu0 0.0
    %255 = vmatprep.subr.mxu0 0.0
    %256 = vmatpush1.msra.mxu0 0.0
    %257 = vmatprep.subr.mxu0 0.0
    %258 = vmatpush1.msra.mxu0 0.0
    %259 = vmatprep.subr.mxu0 0.0
    %260 = vmatpush1.msra.mxu0 0.0
    %261 = vmatprep.subr.mxu0 0.0
    %262 = vmatpush1.msra.mxu0 0.0
    %263 = vmatprep.subr.mxu0 0.0
    %264 = vmatpush1.msra.mxu0 0.0
    %265 = vmatprep.subr.mxu0 0.0
    %266 = vmatpush1.msra.mxu0 %v123
    %267 = vmatprep.subr.mxu0 0.0
    %268 = vmatpush2.msra.mxu0 0.0
    %269 = vmatprep.subr.mxu0 0.0
    %270 = vmatpush2.msra.mxu0 0.0
    %271 = vmatprep.subr.mxu0 0.0
    %272 = vmatpush2.msra.mxu0 0.0
    %273 = vmatprep.subr.mxu0 0.0
    %274 = vmatpush2.msra.mxu0 0.0
    %275 = vmatprep.subr.mxu0 0.0
    %276 = vmatpush2.msra.mxu0 0.0
    %277 = vmatprep.subr.mxu0 0.0
    %278 = vmatpush2.msra.mxu0 0.0
    %279 = vmatprep.subr.mxu0 0.0
    %280 = vmatpush2.msra.mxu0 0.0
    %281 = vmatprep.subr.mxu0 0.0
    %282 = vmatpush2.msra.mxu0 0.0
    %283 = vmatprep.subr.mxu0 0.0
    %284 = vmatpush2.msra.mxu0 0.0
    %285 = vmatprep.subr.mxu0 0.0
    %286 = vmatpush2.msra.mxu0 0.0
    %287 = vmatprep.subr.mxu0 0.0
    %288 = vmatpush2.msra.mxu0 0.0
    %289 = vmatprep.subr.mxu0 0.0
    %290 = vmatpush2.msra.mxu0 0.0
    %291 = vmatprep.subr.mxu0 0.0
    %292 = vmatpush2.msra.mxu0 0.0
    %293 = vmatprep.subr.mxu0 0.0
    %294 = vmatpush2.msra.mxu0 0.0
    %295 = vmatprep.subr.mxu0 0.0
    %296 = vmatpush2.msra.mxu0 0.0
    %297 = vmatprep.subr.mxu0 0.0
    %298 = vmatpush2.msra.mxu0 0.0
    %299 = vmatprep.mubr.f32.mxu0 0.0
    %300 = vmatmul.mubr.f32.gmra.mxu0 %v233
    %v301 = vpop.f32.mrf.mxu0
    %v302 = vadd.f32 0.0, %v301
    %v303 = vpop.f32.mrf.mxu0
    %304 = vdwg.mxu0
    %v305 = vrcp.pop %v230
    %v306 = vmul.f32 %v302, %v305
    %v307 = vld [vmem:[#allocation7] sm:$0xff]
    %v308 = vld [vmem:[#allocation7 + $0x8] sm:$0xff]
    %v309 = vld [vmem:[#allocation8] sm:$0xff]
    %v310 = vld [vmem:[#allocation8 + $0x8] sm:$0xff]
    %v312 = vsel %vm142, %v306, 0
    %314 = vmatprep.subr.mxu0 0.0
    %315 = vmatpush1.msra.mxu0 0.0
    %316 = vmatprep.subr.mxu0 0.0
    %317 = vmatpush1.msra.mxu0 0.0
    %318 = vmatprep.subr.mxu0 0.0
    %319 = vmatpush1.msra.mxu0 0.0
    %320 = vmatprep.subr.mxu0 0.0
    %321 = vmatpush1.msra.mxu0 0.0
    %322 = vmatprep.subr.mxu0 0.0
    %323 = vmatpush1.msra.mxu0 0.0
    %324 = vmatprep.subr.mxu0 0.0
    %325 = vmatpush1.msra.mxu0 0.0
    %326 = vmatprep.subr.mxu0 0.0
    %327 = vmatpush1.msra.mxu0 0.0
    %328 = vmatprep.subr.mxu0 0.0
    %329 = vmatpush1.msra.mxu0 0.0
    %330 = vmatprep.subr.mxu0 0.0
    %331 = vmatpush1.msra.mxu0 0.0
    %332 = vmatprep.subr.mxu0 0.0
    %333 = vmatpush1.msra.mxu0 0.0
    %334 = vmatprep.subr.mxu0 0.0
    %335 = vmatpush1.msra.mxu0 0.0
    %336 = vmatprep.subr.mxu0 0.0
    %337 = vmatpush1.msra.mxu0 0.0
    %338 = vmatprep.subr.mxu0 0.0
    %339 = vmatpush1.msra.mxu0 0.0
    %340 = vmatprep.subr.mxu0 0.0
    %341 = vmatpush1.msra.mxu0 0.0
    %342 = vmatprep.subr.mxu0 0.0
    %343 = vmatpush1.msra.mxu0 %v310
    %344 = vmatprep.subr.mxu0 0.0
    %345 = vmatpush1.msra.mxu0 %v309
    %346 = vmatprep.subr.mxu0 0.0
    %347 = vmatpush2.msra.mxu0 0.0
    %348 = vmatprep.subr.mxu0 0.0
    %349 = vmatpush2.msra.mxu0 0.0
    %350 = vmatprep.subr.mxu0 0.0
    %351 = vmatpush2.msra.mxu0 0.0
    %352 = vmatprep.subr.mxu0 0.0
    %353 = vmatpush2.msra.mxu0 0.0
    %354 = vmatprep.subr.mxu0 0.0
    %355 = vmatpush2.msra.mxu0 0.0
    %356 = vmatprep.subr.mxu0 0.0
    %357 = vmatpush2.msra.mxu0 0.0
    %358 = vmatprep.subr.mxu0 0.0
    %359 = vmatpush2.msra.mxu0 0.0
    %360 = vmatprep.subr.mxu0 0.0
    %361 = vmatpush2.msra.mxu0 0.0
    %362 = vmatprep.subr.mxu0 0.0
    %363 = vmatpush2.msra.mxu0 0.0
    %364 = vmatprep.subr.mxu0 0.0
    %365 = vmatpush2.msra.mxu0 0.0
    %366 = vmatprep.subr.mxu0 0.0
    %367 = vmatpush2.msra.mxu0 0.0
    %368 = vmatprep.subr.mxu0 0.0
    %369 = vmatpush2.msra.mxu0 0.0
    %370 = vmatprep.subr.mxu0 0.0
    %371 = vmatpush2.msra.mxu0 0.0
    %372 = vmatprep.subr.mxu0 0.0
    %373 = vmatpush2.msra.mxu0 0.0
    %374 = vmatprep.subr.mxu0 0.0
    %375 = vmatpush2.msra.mxu0 0.0
    %376 = vmatprep.subr.mxu0 0.0
    %377 = vmatpush2.msra.mxu0 0.0
    %378 = vmatprep.mubr.f32.mxu0 0.0
    %379 = vmatmul.mubr.f32.gmra.mxu0 %v312
    %v380 = vpop.f32.mrf.mxu0
    %v381 = vadd.f32 0.0, %v380
    %v382 = vpop.f32.mrf.mxu0
    %383 = vdwg.mxu0
    %v385 = vsel %vm142, %v217, 0
    %387 = vmatprep.subr.mxu0 0.0
    %388 = vmatpush1.msra.mxu0 0.0
    %389 = vmatprep.subr.mxu0 0.0
    %390 = vmatpush1.msra.mxu0 0.0
    %391 = vmatprep.subr.mxu0 0.0
    %392 = vmatpush1.msra.mxu0 0.0
    %393 = vmatprep.subr.mxu0 0.0
    %394 = vmatpush1.msra.mxu0 0.0
    %395 = vmatprep.subr.mxu0 0.0
    %396 = vmatpush1.msra.mxu0 0.0
    %397 = vmatprep.subr.mxu0 0.0
    %398 = vmatpush1.msra.mxu0 0.0
    %399 = vmatprep.subr.mxu0 0.0
    %400 = vmatpush1.msra.mxu0 0.0
    %401 = vmatprep.subr.mxu0 0.0
    %402 = vmatpush1.msra.mxu0 0.0
    %403 = vmatprep.subr.mxu0 0.0
    %404 = vmatpush1.msra.mxu0 0.0
    %405 = vmatprep.subr.mxu0 0.0
    %406 = vmatpush1.msra.mxu0 0.0
    %407 = vmatprep.subr.mxu0 0.0
    %408 = vmatpush1.msra.mxu0 0.0
    %409 = vmatprep.subr.mxu0 0.0
    %410 = vmatpush1.msra.mxu0 0.0
    %411 = vmatprep.subr.mxu0 0.0
    %412 = vmatpush1.msra.mxu0 0.0
    %413 = vmatprep.subr.mxu0 0.0
    %414 = vmatpush1.msra.mxu0 0.0
    %415 = vmatprep.subr.mxu0 0.0
    %416 = vmatpush1.msra.mxu0 %v308
    %417 = vmatprep.subr.mxu0 0.0
    %418 = vmatpush1.msra.mxu0 %v307
    %419 = vmatprep.subr.mxu0 0.0
    %420 = vmatpush2.msra.mxu0 0.0
    %421 = vmatprep.subr.mxu0 0.0
    %422 = vmatpush2.msra.mxu0 0.0
    %423 = vmatprep.subr.mxu0 0.0
    %424 = vmatpush2.msra.mxu0 0.0
    %425 = vmatprep.subr.mxu0 0.0
    %426 = vmatpush2.msra.mxu0 0.0
    %427 = vmatprep.subr.mxu0 0.0
    %428 = vmatpush2.msra.mxu0 0.0
    %429 = vmatprep.subr.mxu0 0.0
    %430 = vmatpush2.msra.mxu0 0.0
    %431 = vmatprep.subr.mxu0 0.0
    %432 = vmatpush2.msra.mxu0 0.0
    %433 = vmatprep.subr.mxu0 0.0
    %434 = vmatpush2.msra.mxu0 0.0
    %435 = vmatprep.subr.mxu0 0.0
    %436 = vmatpush2.msra.mxu0 0.0
    %437 = vmatprep.subr.mxu0 0.0
    %438 = vmatpush2.msra.mxu0 0.0
    %439 = vmatprep.subr.mxu0 0.0
    %440 = vmatpush2.msra.mxu0 0.0
    %441 = vmatprep.subr.mxu0 0.0
    %442 = vmatpush2.msra.mxu0 0.0
    %443 = vmatprep.subr.mxu0 0.0
    %444 = vmatpush2.msra.mxu0 0.0
    %445 = vmatprep.subr.mxu0 0.0
    %446 = vmatpush2.msra.mxu0 0.0
    %447 = vmatprep.subr.mxu0 0.0
    %448 = vmatpush2.msra.mxu0 0.0
    %449 = vmatprep.subr.mxu0 0.0
    %450 = vmatpush2.msra.mxu0 0.0
    %451 = vmatprep.mubr.f32.mxu0 0.0
    %452 = vmatmul.mubr.f32.gmra.mxu0 %v385
    %v453 = vpop.f32.mrf.mxu0
    %v454 = vadd.f32 %v381, %v453
    %v455 = vpop.f32.mrf.mxu0
    %456 = vdwg.mxu0
    %v457 = vld [vmem:[#allocation10] sm:$0xff]
    %v459 = vsel %vm231, %v126, 0
    %461 = vmatprep.subr.mxu0 0.0
    %462 = vmatpush1.msra.mxu0 0.0
    %463 = vmatprep.subr.mxu0 0.0
    %464 = vmatpush1.msra.mxu0 0.0
    %465 = vmatprep.subr.mxu0 0.0
    %466 = vmatpush1.msra.mxu0 0.0
    %467 = vmatprep.subr.mxu0 0.0
    %468 = vmatpush1.msra.mxu0 0.0
    %469 = vmatprep.subr.mxu0 0.0
    %470 = vmatpush1.msra.mxu0 0.0
    %471 = vmatprep.subr.mxu0 0.0
    %472 = vmatpush1.msra.mxu0 0.0
    %473 = vmatprep.subr.mxu0 0.0
    %474 = vmatpush1.msra.mxu0 0.0
    %475 = vmatprep.subr.mxu0 0.0
    %476 = vmatpush1.msra.mxu0 0.0
    %477 = vmatprep.subr.mxu0 0.0
    %478 = vmatpush1.msra.mxu0 0.0
    %479 = vmatprep.subr.mxu0 0.0
    %480 = vmatpush1.msra.mxu0 0.0
    %481 = vmatprep.subr.mxu0 0.0
    %482 = vmatpush1.msra.mxu0 0.0
    %483 = vmatprep.subr.mxu0 0.0
    %484 = vmatpush1.msra.mxu0 0.0
    %485 = vmatprep.subr.mxu0 0.0
    %486 = vmatpush1.msra.mxu0 0.0
    %487 = vmatprep.subr.mxu0 0.0
    %488 = vmatpush1.msra.mxu0 0.0
    %489 = vmatprep.subr.mxu0 0.0
    %490 = vmatpush1.msra.mxu0 0.0
    %491 = vmatprep.subr.mxu0 0.0
    %492 = vmatpush1.msra.mxu0 %v457
    %493 = vmatprep.subr.mxu0 0.0
    %494 = vmatpush2.msra.mxu0 0.0
    %495 = vmatprep.subr.mxu0 0.0
    %496 = vmatpush2.msra.mxu0 0.0
    %497 = vmatprep.subr.mxu0 0.0
    %498 = vmatpush2.msra.mxu0 0.0
    %499 = vmatprep.subr.mxu0 0.0
    %500 = vmatpush2.msra.mxu0 0.0
    %501 = vmatprep.subr.mxu0 0.0
    %502 = vmatpush2.msra.mxu0 0.0
    %503 = vmatprep.subr.mxu0 0.0
    %504 = vmatpush2.msra.mxu0 0.0
    %505 = vmatprep.subr.mxu0 0.0
    %506 = vmatpush2.msra.mxu0 0.0
    %507 = vmatprep.subr.mxu0 0.0
    %508 = vmatpush2.msra.mxu0 0.0
    %509 = vmatprep.subr.mxu0 0.0
    %510 = vmatpush2.msra.mxu0 0.0
    %511 = vmatprep.subr.mxu0 0.0
    %512 = vmatpush2.msra.mxu0 0.0
    %513 = vmatprep.subr.mxu0 0.0
    %514 = vmatpush2.msra.mxu0 0.0
    %515 = vmatprep.subr.mxu0 0.0
    %516 = vmatpush2.msra.mxu0 0.0
    %517 = vmatprep.subr.mxu0 0.0
    %518 = vmatpush2.msra.mxu0 0.0
    %519 = vmatprep.subr.mxu0 0.0
    %520 = vmatpush2.msra.mxu0 0.0
    %521 = vmatprep.subr.mxu0 0.0
    %522 = vmatpush2.msra.mxu0 0.0
    %523 = vmatprep.subr.mxu0 0.0
    %524 = vmatpush2.msra.mxu0 0.0
    %525 = vmatprep.mubr.f32.mxu0 0.0
    %526 = vmatmul.mubr.f32.gmra.mxu0 %v459
    %v527 = vpop.f32.mrf.mxu0
    %v528 = vadd.f32 0.0, %v527
    %v529 = vpop.f32.mrf.mxu0
    %530 = vdwg.mxu0
    %v531 = vadd.f32 %v454, %v528
    %v532 = vld [vmem:[%s8] sm:$0x1]
    %v534 = vlaneseq
    %v535 = vshrl.u32 %v534, 7
    %v536 = vsub.s32 0, %v535
    %v537 = vrot.slane %v532, %v536
    %v539 = vadd.f32 %v531, %v537
    %v540 = vmax.f32 %v539, 0.0
    %v541 = vld [vmem:[#allocation11] sm:$0xff]
    %v542 = vld [vmem:[#allocation11 + $0x8] sm:$0xff]
    %v543 = vld [vmem:[#allocation11 + $0x10] sm:$0xff]
    %v544 = vld [vmem:[#allocation11 + $0x18] sm:$0xff]
    %v545 = vld [vmem:[%s10] sm:$0x1]
    %v547 = vlaneseq
    %v548 = vshrl.u32 %v547, 7
    %v549 = vsub.s32 0, %v548
    %v550 = vrot.slane %v545, %v549
    %vm552 = vcmask 261120
    %v554 = vsel %vm552, %v540, 0
    %556 = vmatprep.subr.mxu0 0.0
    %557 = vmatpush1.msra.mxu0 0.0
    %558 = vmatprep.subr.mxu0 0.0
    %559 = vmatpush1.msra.mxu0 0.0
    %560 = vmatprep.subr.mxu0 0.0
    %561 = vmatpush1.msra.mxu0 0.0
    %562 = vmatprep.subr.mxu0 0.0
    %563 = vmatpush1.msra.mxu0 0.0
    %564 = vmatprep.subr.mxu0 0.0
    %565 = vmatpush1.msra.mxu0 0.0
    %566 = vmatprep.subr.mxu0 0.0
    %567 = vmatpush1.msra.mxu0 0.0
    %568 = vmatprep.subr.mxu0 0.0
    %569 = vmatpush1.msra.mxu0 0.0
    %570 = vmatprep.subr.mxu0 0.0
    %571 = vmatpush1.msra.mxu0 0.0
    %572 = vmatprep.subr.mxu0 0.0
    %573 = vmatpush1.msra.mxu0 0.0
    %574 = vmatprep.subr.mxu0 0.0
    %575 = vmatpush1.msra.mxu0 0.0
    %576 = vmatprep.subr.mxu0 0.0
    %577 = vmatpush1.msra.mxu0 0.0
    %578 = vmatprep.subr.mxu0 0.0
    %579 = vmatpush1.msra.mxu0 0.0
    %580 = vmatprep.subr.mxu0 0.0
    %581 = vmatpush1.msra.mxu0 %v544
    %582 = vmatprep.subr.mxu0 0.0
    %583 = vmatpush1.msra.mxu0 %v543
    %584 = vmatprep.subr.mxu0 0.0
    %585 = vmatpush1.msra.mxu0 %v542
    %586 = vmatprep.subr.mxu0 0.0
    %587 = vmatpush1.msra.mxu0 %v541
    %588 = vmatprep.subr.mxu0 0.0
    %589 = vmatpush2.msra.mxu0 0.0
    %590 = vmatprep.subr.mxu0 0.0
    %591 = vmatpush2.msra.mxu0 0.0
    %592 = vmatprep.subr.mxu0 0.0
    %593 = vmatpush2.msra.mxu0 0.0
    %594 = vmatprep.subr.mxu0 0.0
    %595 = vmatpush2.msra.mxu0 0.0
    %596 = vmatprep.subr.mxu0 0.0
    %597 = vmatpush2.msra.mxu0 0.0
    %598 = vmatprep.subr.mxu0 0.0
    %599 = vmatpush2.msra.mxu0 0.0
    %600 = vmatprep.subr.mxu0 0.0
    %601 = vmatpush2.msra.mxu0 0.0
    %602 = vmatprep.subr.mxu0 0.0
    %603 = vmatpush2.msra.mxu0 0.0
    %604 = vmatprep.subr.mxu0 0.0
    %605 = vmatpush2.msra.mxu0 0.0
    %606 = vmatprep.subr.mxu0 0.0
    %607 = vmatpush2.msra.mxu0 0.0
    %608 = vmatprep.subr.mxu0 0.0
    %609 = vmatpush2.msra.mxu0 0.0
    %610 = vmatprep.subr.mxu0 0.0
    %611 = vmatpush2.msra.mxu0 0.0
    %612 = vmatprep.subr.mxu0 0.0
    %613 = vmatpush2.msra.mxu0 0.0
    %614 = vmatprep.subr.mxu0 0.0
    %615 = vmatpush2.msra.mxu0 0.0
    %616 = vmatprep.subr.mxu0 0.0
    %617 = vmatpush2.msra.mxu0 0.0
    %618 = vmatprep.subr.mxu0 0.0
    %619 = vmatpush2.msra.mxu0 0.0
    %620 = vmatprep.mubr.f32.mxu0 0.0
    %621 = vmatmul.mubr.f32.gmra.mxu0 %v554
    %v622 = vpop.f32.mrf.mxu0
    %v623 = vadd.f32 %v550, %v622
    %v624 = vpop.f32.mrf.mxu0
    %625 = vdwg.mxu0
    %v626 = vmax.f32 %v623, 0.0
    %v627 = vld [vmem:[%s11] sm:$0xff]
    %v628 = vld [vmem:[%s11 + $0x8] sm:$0xff]
    %v629 = vld [vmem:[%s12] sm:$0x1]
    %v631 = vlaneseq
    %v632 = vshrl.u32 %v631, 7
    %v633 = vsub.s32 0, %v632
    %v634 = vrot.slane %v629, %v633
    %v637 = vsel %vm142, %v626, 0
    %639 = vmatprep.subr.mxu0 0.0
    %640 = vmatpush1.msra.mxu0 0.0
    %641 = vmatprep.subr.mxu0 0.0
    %642 = vmatpush1.msra.mxu0 0.0
    %643 = vmatprep.subr.mxu0 0.0
    %644 = vmatpush1.msra.mxu0 0.0
    %645 = vmatprep.subr.mxu0 0.0
    %646 = vmatpush1.msra.mxu0 0.0
    %647 = vmatprep.subr.mxu0 0.0
    %648 = vmatpush1.msra.mxu0 0.0
    %649 = vmatprep.subr.mxu0 0.0
    %650 = vmatpush1.msra.mxu0 0.0
    %651 = vmatprep.subr.mxu0 0.0
    %652 = vmatpush1.msra.mxu0 0.0
    %653 = vmatprep.subr.mxu0 0.0
    %654 = vmatpush1.msra.mxu0 0.0
    %655 = vmatprep.subr.mxu0 0.0
    %656 = vmatpush1.msra.mxu0 0.0
    %657 = vmatprep.subr.mxu0 0.0
    %658 = vmatpush1.msra.mxu0 0.0
    %659 = vmatprep.subr.mxu0 0.0
    %660 = vmatpush1.msra.mxu0 0.0
    %661 = vmatprep.subr.mxu0 0.0
    %662 = vmatpush1.msra.mxu0 0.0
    %663 = vmatprep.subr.mxu0 0.0
    %664 = vmatpush1.msra.mxu0 0.0
    %665 = vmatprep.subr.mxu0 0.0
    %666 = vmatpush1.msra.mxu0 0.0
    %667 = vmatprep.subr.mxu0 0.0
    %668 = vmatpush1.msra.mxu0 %v628
    %669 = vmatprep.subr.mxu0 0.0
    %670 = vmatpush1.msra.mxu0 %v627
    %671 = vmatprep.subr.mxu0 0.0
    %672 = vmatpush2.msra.mxu0 0.0
    %673 = vmatprep.subr.mxu0 0.0
    %674 = vmatpush2.msra.mxu0 0.0
    %675 = vmatprep.subr.mxu0 0.0
    %676 = vmatpush2.msra.mxu0 0.0
    %677 = vmatprep.subr.mxu0 0.0
    %678 = vmatpush2.msra.mxu0 0.0
    %679 = vmatprep.subr.mxu0 0.0
    %680 = vmatpush2.msra.mxu0 0.0
    %681 = vmatprep.subr.mxu0 0.0
    %682 = vmatpush2.msra.mxu0 0.0
    %683 = vmatprep.subr.mxu0 0.0
    %684 = vmatpush2.msra.mxu0 0.0
    %685 = vmatprep.subr.mxu0 0.0
    %686 = vmatpush2.msra.mxu0 0.0
    %687 = vmatprep.subr.mxu0 0.0
    %688 = vmatpush2.msra.mxu0 0.0
    %689 = vmatprep.subr.mxu0 0.0
    %690 = vmatpush2.msra.mxu0 0.0
    %691 = vmatprep.subr.mxu0 0.0
    %692 = vmatpush2.msra.mxu0 0.0
    %693 = vmatprep.subr.mxu0 0.0
    %694 = vmatpush2.msra.mxu0 0.0
    %695 = vmatprep.subr.mxu0 0.0
    %696 = vmatpush2.msra.mxu0 0.0
    %697 = vmatprep.subr.mxu0 0.0
    %698 = vmatpush2.msra.mxu0 0.0
    %699 = vmatprep.subr.mxu0 0.0
    %700 = vmatpush2.msra.mxu0 0.0
    %701 = vmatprep.subr.mxu0 0.0
    %702 = vmatpush2.msra.mxu0 0.0
    %703 = vmatprep.mubr.f32.mxu0 0.0
    %704 = vmatmul.mubr.f32.gmra.mxu0 %v637
    %v705 = vpop.f32.mrf.mxu0
    %v706 = vadd.f32 %v634, %v705
    %v707 = vpop.f32.mrf.mxu0
    %708 = vdwg.mxu0
    %v709 = vmax.f32 %v706, 0.0
    %710 = vst.msk [vmem:[#allocation13] sm:$0x3] %vm226, %v709
    // Predicated region
    $region78: #{state_update.1} parent=1 // pred_check
      _
    $region79: #{state_update.1} parent=1 // pred_check_branch
      %712 = sbr.rel (0) target = $region81
    $region80: #{state_update.1} parent=1 // pred_region
      %s714 = ssub.s32 32, 32
      %715 = vsyncadd [#allocation4], %s714
      %s717 = sshll.u32 [#allocation13], 4
      %s718 = int_to_ptr.vmem [resolvable:$true] %s717
      %720 = dma.vmem_to_hbm [thread:$0]  %s718, 32, %s13, [#allocation4]
    $region81: #{state_update.1} parent=1 // pred_fallthru
      _
    // Predicated region
    $region82: #{state_update.1} parent=1 // pred_check
      _
    $region83: #{state_update.1} parent=1 // pred_check_branch
      %722 = sbr.rel (0) target = $region85
    $region84: #{state_update.1} parent=1 // pred_region
      %723 = dma.done [#allocation4], 32
    $region85: #{state_update.1} parent=1 // pred_fallthru
      _
    %724 = vsyncpa [#allocation3], 1
    %725 = vsyncpa [#allocation6], 1
    %726 = vsyncpa [#allocation9], 1
    %727 = vsyncpa [#allocation12], 1
    %728 = vsyncpa [#allocation4], 1

</llo_original>
